<compile_context>
chip_gen: v7x
topology: tpu7x:2x2x1
jax: 0.10.0
libtpu: 0.0.40
codegen_flags: <defaults>
</compile_context>

<pallas_src>
import math
import functools

import jax
import jax.numpy as jnp
from jax.experimental import pallas as pl
from jax.experimental.pallas import tpu as pltpu


def _mha_kernel(x_ref, wqkv_ref, bqkv_ref, wo_ref, bo_ref, o_ref,
                *, num_heads, head_dim, approx_recip):
    # x_ref   : (1, S, D_in)  current batch element (already compute dtype)
    # wqkv_ref: (D_in, 3E)    permuted + transposed qkv weight ([Q|K|V] cols)
    # bqkv_ref: (1, 3E)       permuted bias (f32)
    # wo_ref  : (E, E)        o_proj weight, transposed
    # bo_ref  : (1, E)        o_proj bias (f32)
    # o_ref   : (1, S, E)
    E = num_heads * head_dim
    cdt = wqkv_ref.dtype                     # MXU operand dtype (bf16 or f32)
    scale = 1.0 / math.sqrt(head_dim)

    x = x_ref[0]                             # (S, D_in)

    # Fused QKV projection on the MXU, f32 accumulation, bias added in f32.
    qkv = jnp.dot(x, wqkv_ref[...], preferred_element_type=jnp.float32)
    qkv = qkv + bqkv_ref[...]                # (S, 3E) f32, [Q | K | V] head-major
    qkv_c = qkv.astype(cdt)                  # one cast for the attention matmuls

    # Gather per-head (S, hd) tiles into a single (H, S, hd) stack so all heads
    # run in ONE batched dot_general per phase.
    def heads(block):                        # block: 0 -> Q, 1 -> K, 2 -> V
        base = block * E
        return jnp.stack(
            [qkv_c[:, base + h * head_dim: base + (h + 1) * head_dim]
             for h in range(num_heads)], axis=0)

    q, k, v = heads(0), heads(1), heads(2)   # each (H, S, hd)

    # Batched scaled dot-product attention. Contracting the last dim of both
    # q and k avoids an explicit k transpose.
    logits = jnp.einsum("hqd,hkd->hqk", q, k,
                        preferred_element_type=jnp.float32) * scale
    # Numerically-stable softmax, all in f32 (v5e has no bf16 VPU/EUP path).
    logits = logits - jnp.max(logits, axis=-1, keepdims=True)
    p = jnp.exp(logits)
    attn = p * pl.reciprocal(jnp.sum(p, axis=-1, keepdims=True),
                             approx=approx_recip)

    vals = jnp.einsum("hqk,hkd->hqd", attn.astype(cdt), v,
                      preferred_element_type=jnp.float32)    # (H, S, hd) f32

    # Heads back onto the lane axis: column h*hd + d, identical to torch's
    # permute(0, 2, 1, 3).reshape(B, S, E).
    values = jnp.concatenate([vals[h] for h in range(num_heads)], axis=-1)

    # Output projection.
    o = jnp.dot(values.astype(cdt), wo_ref[...],
                preferred_element_type=jnp.float32) + bo_ref[...]
    o_ref[0] = o.astype(o_ref.dtype)


def multihead_attention(x, wqkv, bqkv, wo, bo, *, num_heads,
                        compute_dtype=jnp.bfloat16):
    """x: (B, S, D_in); wqkv: (3E, D_in); bqkv: (3E,); wo: (E, E); bo: (E,)."""
    B, S, D_in = x.shape
    three_e = wqkv.shape[0]
    E = three_e // 3
    head_dim = E // num_heads
    out_dtype = x.dtype

    # Wrapper-side weight plumbing (runs once, outside the kernel):
    #  * permute qkv_proj output columns to [Q | K | V], head-major inside each,
    #  * pre-transpose weights so the kernel does plain x @ W,
    #  * cast MXU operands to compute_dtype; biases stay f32.
    j = jnp.arange(three_e)
    which, rem = j // E, j % E
    old_col = (rem // head_dim) * (3 * head_dim) + which * head_dim + rem % head_dim
    wqkv_p = jnp.take(wqkv, old_col, axis=0).T.astype(compute_dtype)   # (D_in, 3E)
    bqkv_p = jnp.take(bqkv, old_col, axis=0).reshape(1, three_e).astype(jnp.float32)
    wo_t = wo.T.astype(compute_dtype)                                  # (E, E)
    bo_2d = bo.reshape(1, E).astype(jnp.float32)
    x_c = x.astype(compute_dtype)

    approx = jnp.dtype(compute_dtype) != jnp.dtype(jnp.float32)
    kernel = functools.partial(_mha_kernel, num_heads=num_heads,
                               head_dim=head_dim, approx_recip=approx)

    return pl.pallas_call(
        kernel,
        out_shape=jax.ShapeDtypeStruct((B, S, E), out_dtype),
        grid_spec=pltpu.PrefetchScalarGridSpec(
            num_scalar_prefetch=0,
            grid=(B,),
            in_specs=[
                pl.BlockSpec((1, S, D_in), lambda b: (b, 0, 0)),
                pl.BlockSpec((D_in, three_e), lambda b: (0, 0)),
                pl.BlockSpec((1, three_e), lambda b: (0, 0)),
                pl.BlockSpec((E, E), lambda b: (0, 0)),
                pl.BlockSpec((1, E), lambda b: (0, 0)),
            ],
            out_specs=pl.BlockSpec((1, S, E), lambda b: (b, 0, 0)),
        ),
        compiler_params=pltpu.CompilerParams(
            dimension_semantics=("parallel",)),
    )(x_c, wqkv_p, bqkv_p, wo_t, bo_2d)


def _reference(x, wqkv, bqkv, wo, bo, num_heads):
    """Pure-JAX replica of the PyTorch forward (no mask)."""
    B, S, D_in = x.shape
    E = wqkv.shape[0] // 3
    hd = E // num_heads
    qkv = x @ wqkv.T + bqkv                                   # (B,S,3E)
    qkv = qkv.reshape(B, S, num_heads, 3 * hd).transpose(0, 2, 1, 3)
    q, k, v = qkv[..., :hd], qkv[..., hd:2 * hd], qkv[..., 2 * hd:]
    logits = jnp.einsum("bhqd,bhkd->bhqk", q, k) / math.sqrt(hd)
    attn = jax.nn.softmax(logits, axis=-1)
    vals = jnp.einsum("bhqk,bhkd->bhqd", attn, v)
    vals = vals.transpose(0, 2, 1, 3).reshape(B, S, E)
    return vals @ wo.T + bo


def _xavier_uniform(key, shape):
    # PyTorch nn.init.xavier_uniform_ for a Linear weight (out, in):
    fan_out, fan_in = shape
    bound = math.sqrt(6.0 / (fan_in + fan_out))
    return jax.random.uniform(key, shape, jnp.float32, -bound, bound)


if __name__ == "__main__":
    B, S, D_in = 2, 8, 16
    E, H = 32, 4

    key = jax.random.PRNGKey(0)
    kx, kqkv, ko = jax.random.split(key, 3)

    x = jax.random.normal(kx, (B, S, D_in), jnp.float32)
    wqkv = _xavier_uniform(kqkv, (3 * E, D_in))   # qkv_proj.weight
    bqkv = jnp.zeros((3 * E,), jnp.float32)       # qkv_proj.bias (filled with 0)
    wo = _xavier_uniform(ko, (E, E))              # o_proj.weight
    bo = jnp.zeros((E,), jnp.float32)             # o_proj.bias (filled with 0)

    ref = _reference(x, wqkv, bqkv, wo, bo, H)

    # Exact-math path (f32 MXU operands, exact reciprocal): tight check.
    out_f32 = jax.block_until_ready(
        multihead_attention(x, wqkv, bqkv, wo, bo, num_heads=H,
                            compute_dtype=jnp.float32))
    assert out_f32.shape == (B, S, E)
    assert jnp.allclose(out_f32, ref, atol=1e-4, rtol=1e-4), \
        "f32 kernel mismatch vs pure-JAX reference"

    # Fast path (bf16 MXU operands, f32 accumulation/softmax, EUP reciprocal).
    out_bf16 = jax.block_until_ready(
        multihead_attention(x, wqkv, bqkv, wo, bo, num_heads=H,
                            compute_dtype=jnp.bfloat16))
    assert out_bf16.shape == (B, S, E)
    assert jnp.allclose(out_bf16, ref, atol=5e-2, rtol=5e-2), \
        "bf16 kernel mismatch vs pure-JAX reference"

    print("KERNEL_OK")
</pallas_src>

<mosaic_0001>
module attributes {stable_mosaic.version = 11 : i64} {
  func.func @_mha_kernel(%arg0: i32, %arg1: memref<1x8x16xf32, #tpu.memory_space<vmem>>, %arg2: memref<16x96xf32, #tpu.memory_space<vmem>>, %arg3: memref<1x96xf32, #tpu.memory_space<vmem>>, %arg4: memref<32x32xf32, #tpu.memory_space<vmem>>, %arg5: memref<1x32xf32, #tpu.memory_space<vmem>>, %arg6: memref<1x8x32xf32, #tpu.memory_space<vmem>>) attributes {dimension_semantics = [#tpu.dimension_semantics<parallel>], iteration_bounds = array<i64: 2>, scalar_prefetch = 0 : i64, scratch_operands = 0 : i64, tpu.core_type = #tpu.core_type<tc>, window_params = [{transform_indices = @transform_0, window_bounds = array<i64: 1, 8, 16>}, {pipeline_mode = #tpu.pipeline_mode<synchronous>, transform_indices = @transform_1, window_bounds = array<i64: 16, 96>}, {pipeline_mode = #tpu.pipeline_mode<synchronous>, transform_indices = @transform_2, window_bounds = array<i64: 1, 96>}, {pipeline_mode = #tpu.pipeline_mode<synchronous>, transform_indices = @transform_3, window_bounds = array<i64: 32, 32>}, {pipeline_mode = #tpu.pipeline_mode<synchronous>, transform_indices = @transform_4, window_bounds = array<i64: 1, 32>}, {transform_indices = @transform_5, window_bounds = array<i64: 1, 8, 32>}]} {
    %c0 = arith.constant 0 : index
    %c0_0 = arith.constant 0 : index
    %c0_1 = arith.constant 0 : index
    %0 = vector.load %arg1[%c0, %c0_0, %c0_1] : memref<1x8x16xf32, #tpu.memory_space<vmem>>, vector<1x8x16xf32>
    %1 = vector.shape_cast %0 : vector<1x8x16xf32> to vector<8x16xf32>
    %c0_2 = arith.constant 0 : index
    %c0_3 = arith.constant 0 : index
    %2 = vector.load %arg2[%c0_2, %c0_3] : memref<16x96xf32, #tpu.memory_space<vmem>>, vector<16x96xf32>
    %cst = arith.constant dense<0.000000e+00> : vector<8x96xf32>
    %3 = tpu.matmul %1, %2, %cst {dimension_numbers = #tpu.dot_dimension_numbers<[1], [0], [0], [1], [0, 0, 1, 1], [], []>} : vector<8x16xf32>, vector<16x96xf32>, vector<8x96xf32> -> vector<8x96xf32>
    %c0_4 = arith.constant 0 : index
    %c0_5 = arith.constant 0 : index
    %4 = vector.load %arg3[%c0_4, %c0_5] : memref<1x96xf32, #tpu.memory_space<vmem>>, vector<1x96xf32>
    %5 = vector.broadcast %4 : vector<1x96xf32> to vector<8x96xf32>
    %6 = arith.addf %3, %5 : vector<8x96xf32>
    %7 = vector.extract_strided_slice %6 {offsets = [0, 0], sizes = [8, 8], strides = [1, 1]} : vector<8x96xf32> to vector<8x8xf32>
    %8 = vector.extract_strided_slice %6 {offsets = [0, 8], sizes = [8, 8], strides = [1, 1]} : vector<8x96xf32> to vector<8x8xf32>
    %9 = vector.extract_strided_slice %6 {offsets = [0, 16], sizes = [8, 8], strides = [1, 1]} : vector<8x96xf32> to vector<8x8xf32>
    %10 = vector.extract_strided_slice %6 {offsets = [0, 24], sizes = [8, 8], strides = [1, 1]} : vector<8x96xf32> to vector<8x8xf32>
    %11 = vector.shape_cast %7 : vector<8x8xf32> to vector<1x8x8xf32>
    %12 = vector.shape_cast %8 : vector<8x8xf32> to vector<1x8x8xf32>
    %13 = vector.shape_cast %9 : vector<8x8xf32> to vector<1x8x8xf32>
    %14 = vector.shape_cast %10 : vector<8x8xf32> to vector<1x8x8xf32>
    %15 = tpu.concatenate %11, %12, %13, %14 in 0 : vector<1x8x8xf32>, vector<1x8x8xf32>, vector<1x8x8xf32>, vector<1x8x8xf32> -> vector<4x8x8xf32>
    %16 = vector.extract_strided_slice %6 {offsets = [0, 32], sizes = [8, 8], strides = [1, 1]} : vector<8x96xf32> to vector<8x8xf32>
    %17 = vector.extract_strided_slice %6 {offsets = [0, 40], sizes = [8, 8], strides = [1, 1]} : vector<8x96xf32> to vector<8x8xf32>
    %18 = vector.extract_strided_slice %6 {offsets = [0, 48], sizes = [8, 8], strides = [1, 1]} : vector<8x96xf32> to vector<8x8xf32>
    %19 = vector.extract_strided_slice %6 {offsets = [0, 56], sizes = [8, 8], strides = [1, 1]} : vector<8x96xf32> to vector<8x8xf32>
    %20 = vector.shape_cast %16 : vector<8x8xf32> to vector<1x8x8xf32>
    %21 = vector.shape_cast %17 : vector<8x8xf32> to vector<1x8x8xf32>
    %22 = vector.shape_cast %18 : vector<8x8xf32> to vector<1x8x8xf32>
    %23 = vector.shape_cast %19 : vector<8x8xf32> to vector<1x8x8xf32>
    %24 = tpu.concatenate %20, %21, %22, %23 in 0 : vector<1x8x8xf32>, vector<1x8x8xf32>, vector<1x8x8xf32>, vector<1x8x8xf32> -> vector<4x8x8xf32>
    %25 = vector.extract_strided_slice %6 {offsets = [0, 64], sizes = [8, 8], strides = [1, 1]} : vector<8x96xf32> to vector<8x8xf32>
    %26 = vector.extract_strided_slice %6 {offsets = [0, 72], sizes = [8, 8], strides = [1, 1]} : vector<8x96xf32> to vector<8x8xf32>
    %27 = vector.extract_strided_slice %6 {offsets = [0, 80], sizes = [8, 8], strides = [1, 1]} : vector<8x96xf32> to vector<8x8xf32>
    %28 = vector.extract_strided_slice %6 {offsets = [0, 88], sizes = [8, 8], strides = [1, 1]} : vector<8x96xf32> to vector<8x8xf32>
    %29 = vector.shape_cast %25 : vector<8x8xf32> to vector<1x8x8xf32>
    %30 = vector.shape_cast %26 : vector<8x8xf32> to vector<1x8x8xf32>
    %31 = vector.shape_cast %27 : vector<8x8xf32> to vector<1x8x8xf32>
    %32 = vector.shape_cast %28 : vector<8x8xf32> to vector<1x8x8xf32>
    %33 = tpu.concatenate %29, %30, %31, %32 in 0 : vector<1x8x8xf32>, vector<1x8x8xf32>, vector<1x8x8xf32>, vector<1x8x8xf32> -> vector<4x8x8xf32>
    "tpu.trace_start"() <{level = 10 : i32, message = "hqd,hkd->hqk"}> : () -> ()
    %cst_6 = arith.constant dense<0.000000e+00> : vector<4x8x8xf32>
    %34 = tpu.matmul %15, %24, %cst_6 {dimension_numbers = #tpu.dot_dimension_numbers<[2], [2], [1], [1], [0, 0, 0, 1, 1, 1], [0], [0]>} : vector<4x8x8xf32>, vector<4x8x8xf32>, vector<4x8x8xf32> -> vector<4x8x8xf32>
    "tpu.trace_stop"() : () -> ()
    %cst_7 = arith.constant 0.353553385 : f32
    %35 = vector.broadcast %cst_7 : f32 to vector<4x8x8xf32>
    %36 = arith.mulf %34, %35 : vector<4x8x8xf32>
    %cst_8 = arith.constant dense<0xFF800000> : vector<4x8xf32>
    %37 = vector.multi_reduction <maximumf>, %36, %cst_8 [2] : vector<4x8x8xf32> to vector<4x8xf32>
    %38 = vector.shape_cast %37 : vector<4x8xf32> to vector<4x8x1xf32>
    %39 = vector.broadcast %38 : vector<4x8x1xf32> to vector<4x8x8xf32>
    %40 = arith.subf %36, %39 : vector<4x8x8xf32>
    %41 = math.exp %40 : vector<4x8x8xf32>
    %cst_9 = arith.constant dense<0.000000e+00> : vector<4x8xf32>
    %42 = vector.multi_reduction <add>, %41, %cst_9 [2] : vector<4x8x8xf32> to vector<4x8xf32>
    %43 = vector.shape_cast %42 : vector<4x8xf32> to vector<4x8x1xf32>
    %44 = tpu.reciprocal %43 : vector<4x8x1xf32> -> vector<4x8x1xf32>
    %45 = vector.broadcast %44 : vector<4x8x1xf32> to vector<4x8x8xf32>
    %46 = arith.mulf %41, %45 : vector<4x8x8xf32>
    "tpu.trace_start"() <{level = 10 : i32, message = "hqk,hkd->hqd"}> : () -> ()
    %cst_10 = arith.constant dense<0.000000e+00> : vector<4x8x8xf32>
    %47 = tpu.matmul %46, %33, %cst_10 {dimension_numbers = #tpu.dot_dimension_numbers<[2], [1], [1], [2], [0, 0, 0, 1, 1, 2], [0], [0]>} : vector<4x8x8xf32>, vector<4x8x8xf32>, vector<4x8x8xf32> -> vector<4x8x8xf32>
    "tpu.trace_stop"() : () -> ()
    %48 = vector.extract_strided_slice %47 {offsets = [0, 0, 0], sizes = [1, 8, 8], strides = [1, 1, 1]} : vector<4x8x8xf32> to vector<1x8x8xf32>
    %49 = vector.shape_cast %48 : vector<1x8x8xf32> to vector<8x8xf32>
    %50 = vector.extract_strided_slice %47 {offsets = [1, 0, 0], sizes = [1, 8, 8], strides = [1, 1, 1]} : vector<4x8x8xf32> to vector<1x8x8xf32>
    %51 = vector.shape_cast %50 : vector<1x8x8xf32> to vector<8x8xf32>
    %52 = vector.extract_strided_slice %47 {offsets = [2, 0, 0], sizes = [1, 8, 8], strides = [1, 1, 1]} : vector<4x8x8xf32> to vector<1x8x8xf32>
    %53 = vector.shape_cast %52 : vector<1x8x8xf32> to vector<8x8xf32>
    %54 = vector.extract_strided_slice %47 {offsets = [3, 0, 0], sizes = [1, 8, 8], strides = [1, 1, 1]} : vector<4x8x8xf32> to vector<1x8x8xf32>
    %55 = vector.shape_cast %54 : vector<1x8x8xf32> to vector<8x8xf32>
    %56 = tpu.concatenate %49, %51, %53, %55 in 1 : vector<8x8xf32>, vector<8x8xf32>, vector<8x8xf32>, vector<8x8xf32> -> vector<8x32xf32>
    %c0_11 = arith.constant 0 : index
    %c0_12 = arith.constant 0 : index
    %57 = vector.load %arg4[%c0_11, %c0_12] : memref<32x32xf32, #tpu.memory_space<vmem>>, vector<32x32xf32>
    %cst_13 = arith.constant dense<0.000000e+00> : vector<8x32xf32>
    %58 = tpu.matmul %56, %57, %cst_13 {dimension_numbers = #tpu.dot_dimension_numbers<[1], [0], [0], [1], [0, 0, 1, 1], [], []>} : vector<8x32xf32>, vector<32x32xf32>, vector<8x32xf32> -> vector<8x32xf32>
    %c0_14 = arith.constant 0 : index
    %c0_15 = arith.constant 0 : index
    %59 = vector.load %arg5[%c0_14, %c0_15] : memref<1x32xf32, #tpu.memory_space<vmem>>, vector<1x32xf32>
    %60 = vector.broadcast %59 : vector<1x32xf32> to vector<8x32xf32>
    %61 = arith.addf %58, %60 : vector<8x32xf32>
    %c0_16 = arith.constant 0 : index
    %c0_17 = arith.constant 0 : index
    %c0_18 = arith.constant 0 : index
    %62 = vector.load %arg6[%c0_16, %c0_17, %c0_18] : memref<1x8x32xf32, #tpu.memory_space<vmem>>, vector<1x8x32xf32>
    %63 = vector.shape_cast %62 : vector<1x8x32xf32> to vector<8x32xf32>
    %64 = vector.shape_cast %61 : vector<8x32xf32> to vector<1x8x32xf32>
    tpu.vector_store %arg6[%c0_16, %c0_17, %c0_18], %64 {strides = array<i32>} : memref<1x8x32xf32, #tpu.memory_space<vmem>>, vector<1x8x32xf32>,
    return
  }
  func.func @transform_0(%arg0: i32) -> (i32, i32, i32) {
    %c0_i32 = arith.constant 0 : i32
    %c0_i32_0 = arith.constant 0 : i32
    %c0_i32_1 = arith.constant 0 : i32
    return %arg0, %c0_i32, %c0_i32_0 : i32, i32, i32
  }
  func.func @transform_1(%arg0: i32) -> (i32, i32) {
    %c0_i32 = arith.constant 0 : i32
    %c0_i32_0 = arith.constant 0 : i32
    %c0_i32_1 = arith.constant 0 : i32
    return %c0_i32, %c0_i32_0 : i32, i32
  }
  func.func @transform_2(%arg0: i32) -> (i32, i32) {
    %c0_i32 = arith.constant 0 : i32
    %c0_i32_0 = arith.constant 0 : i32
    %c0_i32_1 = arith.constant 0 : i32
    return %c0_i32, %c0_i32_0 : i32, i32
  }
  func.func @transform_3(%arg0: i32) -> (i32, i32) {
    %c0_i32 = arith.constant 0 : i32
    %c0_i32_0 = arith.constant 0 : i32
    %c0_i32_1 = arith.constant 0 : i32
    return %c0_i32, %c0_i32_0 : i32, i32
  }
  func.func @transform_4(%arg0: i32) -> (i32, i32) {
    %c0_i32 = arith.constant 0 : i32
    %c0_i32_0 = arith.constant 0 : i32
    %c0_i32_1 = arith.constant 0 : i32
    return %c0_i32, %c0_i32_0 : i32, i32
  }
  func.func @transform_5(%arg0: i32) -> (i32, i32, i32) {
    %c0_i32 = arith.constant 0 : i32
    %c0_i32_0 = arith.constant 0 : i32
    %c0_i32_1 = arith.constant 0 : i32
    return %arg0, %c0_i32, %c0_i32_0 : i32, i32, i32
  }
}

</mosaic_0001>

<llo_original>
// kernel: tpu_custom_call.1
$region0: #{tpu_custom_call.1}
  #allocation0 [shape = 'u32[]', space=smem, size = 0x4, offset = 0x4, fixed_abs, tag = 'smem constant byte address 0x4 - core index']
  #allocation1 [shape = 'u32[144,128]{1,0:T(1,128)}', space=vmem, size = 0x12000, scoped, tag = 'internal scratch']
  %s0 = inlined_call_operand.hbm [shape: f32[2,8,16], index: 0, kind: input, shape index: {}]
  %s1 = inlined_call_operand.hbm [shape: f32[16,96], index: 1, kind: input, shape index: {}]
  %s2 = inlined_call_operand.vmem [shape: f32[1,96], index: 2, kind: input, shape index: {}]
  %s3 = inlined_call_operand.hbm [shape: f32[32,32], index: 3, kind: input, shape index: {}]
  %s4 = inlined_call_operand.vmem [shape: f32[1,32], index: 4, kind: input, shape index: {}]
  %s5 = inlined_call_operand.hbm [shape: f32[2,8,32], index: 5, kind: output, shape index: {}]
  %s6 = sld [smem:[#allocation0]]
  $region65: #{tpu_custom_call.1} parent=0
    _
  %s8 = ssub.s32 1, %s6
  %s9 = scalar_select 0, %s8, %s6
  $region1: #{tpu_custom_call.1} parent=0
    #allocation2 [shape = 'u8[8192]{0}', space=vmem, size = 0x2000, scoped, tag = 'input window, operand 0']
    #allocation3 [shape = 's32[2]{0}', space=sflag, size = 0x8, scoped, tag = 'scoped memory for tpu_custom_call.1']
    #allocation4 [shape = 's32[2]{0}', space=sflag, size = 0x8, scoped, tag = 'scoped memory for tpu_custom_call.1']
    #allocation5 [shape = 'u8[8192]{0}', space=vmem, size = 0x2000, scoped, tag = 'input window, operand 1, single buffered']
    #allocation6 [shape = 's32[1]{0}', space=sflag, size = 0x4, scoped, tag = 'scoped memory for tpu_custom_call.1']
    #allocation7 [shape = 'u8[16384]{0}', space=vmem, size = 0x4000, scoped, tag = 'input window, operand 3, single buffered']
    #allocation8 [shape = 'u8[8192]{0}', space=vmem, size = 0x2000, scoped, tag = 'output window, operand 0']
    %10 = vsyncpa [#allocation3], 0
    %s11 = scalar_lea.sflag [#allocation3], 1
    %12 = vsyncpa %s11, 0
    %13 = vsyncpa [#allocation6], 0
    %14 = vsyncpa [#allocation4], 0
    %s15 = scalar_lea.sflag [#allocation4], 1
    %16 = vsyncpa %s15, 0
    loop: start=0, step=1, limit=4
    $region2: #{tpu_custom_call.1} parent=1 // loop_pre_header
      _
    $region3: #{tpu_custom_call.1} parent=1 // loop_header
      %s18 = sphi 0, %s22
      %p19 = scmp.ge.s32.totalorder %s18, 4
      %s28 = sphi 0, %s30
      %s31 = sphi 0, %s28
      %s32 = sphi 0, %s31
      %s48 = sphi 0, %s32
      %s52 = sphi 0, %s52
      %s54 = sphi 0, %s52
      %s55 = sphi 0, %s54
      %s69 = sphi 0, %s55
      %s73 = sphi 0, %s73
      %s75 = sphi 0, %s73
      %s76 = sphi 0, %s75
      %s90 = sphi 0, %s76
      %s94 = sphi 0, %s94
      %s96 = sphi 0, %s94
      %s97 = sphi 0, %s96
      %s111 = sphi 0, %s97
      %s115 = sphi 0, %s115
      %s117 = sphi 0, %s115
      %s118 = sphi 0, %s117
      %s132 = sphi 0, %s118
      %s138 = sphi 0, %s140
      %s141 = sphi 0, %s138
      %s142 = sphi 0, %s141
      %s158 = sphi 0, %s142
    $region4: #{tpu_custom_call.1} parent=1 // loop_header_branch
      %21 = sbr.rel (%p19) target = $region8
    $region5: #{tpu_custom_call.1} parent=1 // loop_body
      %s23 = ssub.s32 %s18, 1
      %s24 = ssub.s32 %s18, 2
      %s25 = sadd.s32 %s18, 1
      %s26 = ssub.s32 %s18, %s25
      %p27 = scmp.eq.s32.totalorder %s26, 0
      %s29 = sadd.s32 %s28, 1
      %s30 = scalar_select %p27, %s28, %s29
      %p33 = pneg %p27
      %p34 = scmp.eq.s32.totalorder %s18, 1
      %p35 = por %p33, %p34
      %p36 = scmp.ne.s32.totalorder %s28, %s31
      %p37 = scmp.eq.s32.totalorder %s18, 0
      %p38 = por %p36, %p37
      %p39 = scmp.ne.s32.totalorder %s28, %s31
      %p40 = scmp.eq.s32.totalorder %s23, 1
      %p41 = por %p39, %p40
      %p42 = scmp.ne.s32.totalorder %s31, %s32
      %p43 = scmp.eq.s32.totalorder %s23, 0
      %p44 = por %p42, %p43
      %p45 = scmp.ne.s32.totalorder %s31, %s32
      %p46 = scmp.eq.s32.totalorder %s24, 1
      %p47 = por %p45, %p46
      %p49 = scmp.ne.s32.totalorder %s32, %s48
      %p50 = scmp.eq.s32.totalorder %s24, 0
      %p51 = por %p49, %p50
      %s53 = sadd.s32 %s52, 1
      %p56 = scmp.eq.s32.totalorder %s18, 1
      %p57 = scmp.ne.s32.totalorder %s52, %s54
      %p58 = scmp.eq.s32.totalorder %s18, 0
      %p59 = por %p57, %p58
      %p60 = scmp.ne.s32.totalorder %s52, %s54
      %p61 = scmp.eq.s32.totalorder %s23, 1
      %p62 = por %p60, %p61
      %p63 = scmp.ne.s32.totalorder %s54, %s55
      %p64 = scmp.eq.s32.totalorder %s23, 0
      %p65 = por %p63, %p64
      %p66 = scmp.ne.s32.totalorder %s54, %s55
      %p67 = scmp.eq.s32.totalorder %s24, 1
      %p68 = por %p66, %p67
      %p70 = scmp.ne.s32.totalorder %s55, %s69
      %p71 = scmp.eq.s32.totalorder %s24, 0
      %p72 = por %p70, %p71
      %s74 = sadd.s32 %s73, 1
      %p77 = scmp.eq.s32.totalorder %s18, 1
      %p78 = scmp.ne.s32.totalorder %s73, %s75
      %p79 = scmp.eq.s32.totalorder %s18, 0
      %p80 = por %p78, %p79
      %p81 = scmp.ne.s32.totalorder %s73, %s75
      %p82 = scmp.eq.s32.totalorder %s23, 1
      %p83 = por %p81, %p82
      %p84 = scmp.ne.s32.totalorder %s75, %s76
      %p85 = scmp.eq.s32.totalorder %s23, 0
      %p86 = por %p84, %p85
      %p87 = scmp.ne.s32.totalorder %s75, %s76
      %p88 = scmp.eq.s32.totalorder %s24, 1
      %p89 = por %p87, %p88
      %p91 = scmp.ne.s32.totalorder %s76, %s90
      %p92 = scmp.eq.s32.totalorder %s24, 0
      %p93 = por %p91, %p92
      %s95 = sadd.s32 %s94, 1
      %p98 = scmp.eq.s32.totalorder %s18, 1
      %p99 = scmp.ne.s32.totalorder %s94, %s96
      %p100 = scmp.eq.s32.totalorder %s18, 0
      %p101 = por %p99, %p100
      %p102 = scmp.ne.s32.totalorder %s94, %s96
      %p103 = scmp.eq.s32.totalorder %s23, 1
      %p104 = por %p102, %p103
      %p105 = scmp.ne.s32.totalorder %s96, %s97
      %p106 = scmp.eq.s32.totalorder %s23, 0
      %p107 = por %p105, %p106
      %p108 = scmp.ne.s32.totalorder %s96, %s97
      %p109 = scmp.eq.s32.totalorder %s24, 1
      %p110 = por %p108, %p109
      %p112 = scmp.ne.s32.totalorder %s97, %s111
      %p113 = scmp.eq.s32.totalorder %s24, 0
      %p114 = por %p112, %p113
      %s116 = sadd.s32 %s115, 1
      %p119 = scmp.eq.s32.totalorder %s18, 1
      %p120 = scmp.ne.s32.totalorder %s115, %s117
      %p121 = scmp.eq.s32.totalorder %s18, 0
      %p122 = por %p120, %p121
      %p123 = scmp.ne.s32.totalorder %s115, %s117
      %p124 = scmp.eq.s32.totalorder %s23, 1
      %p125 = por %p123, %p124
      %p126 = scmp.ne.s32.totalorder %s117, %s118
      %p127 = scmp.eq.s32.totalorder %s23, 0
      %p128 = por %p126, %p127
      %p129 = scmp.ne.s32.totalorder %s117, %s118
      %p130 = scmp.eq.s32.totalorder %s24, 1
      %p131 = por %p129, %p130
      %p133 = scmp.ne.s32.totalorder %s118, %s132
      %p134 = scmp.eq.s32.totalorder %s24, 0
      %p135 = por %p133, %p134
      %s136 = ssub.s32 %s18, %s25
      %p137 = scmp.eq.s32.totalorder %s136, 0
      %s139 = sadd.s32 %s138, 1
      %s140 = scalar_select %p137, %s138, %s139
      %p143 = pneg %p137
      %p144 = scmp.eq.s32.totalorder %s18, 1
      %p145 = por %p143, %p144
      %p146 = scmp.ne.s32.totalorder %s138, %s141
      %p147 = scmp.eq.s32.totalorder %s18, 0
      %p148 = por %p146, %p147
      %p149 = scmp.ne.s32.totalorder %s138, %s141
      %p150 = scmp.eq.s32.totalorder %s23, 1
      %p151 = por %p149, %p150
      %p152 = scmp.ne.s32.totalorder %s141, %s142
      %p153 = scmp.eq.s32.totalorder %s23, 0
      %p154 = por %p152, %p153
      %p155 = scmp.ne.s32.totalorder %s141, %s142
      %p156 = scmp.eq.s32.totalorder %s24, 1
      %p157 = por %p155, %p156
      %p159 = scmp.ne.s32.totalorder %s142, %s158
      %p160 = scmp.eq.s32.totalorder %s24, 0
      %p161 = por %p159, %p160
      %p162 = scmp.le.s32.totalorder 1, %s18
      %p163 = scmp.lt.s32.totalorder %s18, 3
      %p164 = pnand %p162, %p163
      %p165 = pneg %p164
      // Predicated region
      $region9: #{tpu_custom_call.1} parent=5 // pred_check
        _
      $region10: #{tpu_custom_call.1} parent=5 // pred_check_branch
        %167 = sbr.rel (%p164) target = $region12
      $region11: #{tpu_custom_call.1} parent=5 // pred_region
        %s168 = ssub.s32 %s18, 1
        // Predicated region
        $region13: #{tpu_custom_call.1} parent=11 // pred_check
          %p169 = pneg %p65
        $region14: #{tpu_custom_call.1} parent=11 // pred_check_branch
          %171 = sbr.rel (%p169) target = $region16
        $region15: #{tpu_custom_call.1} parent=11 // pred_region
          %s173 = ssub.s32 256, 256
          %174 = vsyncadd [#allocation6], %s173
          %s175 = sshll.u32 [#allocation5], 4
          %s176 = int_to_ptr.vmem [resolvable:$true] %s175
          %181 = dma.hbm_to_vmem [thread:$0]  %s1, 256, %s176, [#allocation6], 128, 128, 8
        $region16: #{tpu_custom_call.1} parent=11 // pred_fallthru
          _
        // Predicated region
        $region17: #{tpu_custom_call.1} parent=11 // pred_check
          %p182 = pneg %p86
        $region18: #{tpu_custom_call.1} parent=11 // pred_check_branch
          %184 = sbr.rel (%p182) target = $region20
        $region19: #{tpu_custom_call.1} parent=11 // pred_region
          _
        $region20: #{tpu_custom_call.1} parent=11 // pred_fallthru
          _
        // Predicated region
        $region21: #{tpu_custom_call.1} parent=11 // pred_check
          %p185 = pneg %p107
        $region22: #{tpu_custom_call.1} parent=11 // pred_check_branch
          %187 = sbr.rel (%p185) target = $region24
        $region23: #{tpu_custom_call.1} parent=11 // pred_region
          %s189 = ssub.s32 512, 512
          %190 = vsyncadd [#allocation6], %s189
          %s191 = sshll.u32 [#allocation7], 4
          %s192 = int_to_ptr.vmem [resolvable:$true] %s191
          %197 = dma.hbm_to_vmem [thread:$0]  %s3, 512, %s192, [#allocation6], 128, 128, 8
        $region24: #{tpu_custom_call.1} parent=11 // pred_fallthru
          _
        // Predicated region
        $region25: #{tpu_custom_call.1} parent=11 // pred_check
          %p198 = pneg %p128
        $region26: #{tpu_custom_call.1} parent=11 // pred_check_branch
          %200 = sbr.rel (%p198) target = $region28
        $region27: #{tpu_custom_call.1} parent=11 // pred_region
          _
        $region28: #{tpu_custom_call.1} parent=11 // pred_fallthru
          _
      $region12: #{tpu_custom_call.1} parent=5 // pred_fallthru
        _
      %p201 = scmp.lt.s32.totalorder %s18, 2
      // Predicated region
      $region29: #{tpu_custom_call.1} parent=5 // pred_check
        %p202 = pneg %p201
      $region30: #{tpu_custom_call.1} parent=5 // pred_check_branch
        %204 = sbr.rel (%p202) target = $region32
      $region31: #{tpu_custom_call.1} parent=5 // pred_region
        // Predicated region
        $region33: #{tpu_custom_call.1} parent=31 // pred_check
          %p205 = pneg %p38
        $region34: #{tpu_custom_call.1} parent=31 // pred_check_branch
          %207 = sbr.rel (%p205) target = $region36
        $region35: #{tpu_custom_call.1} parent=31 // pred_region
          %s208 = sand.u32 %s28, 1
          %s209 = scalar_lea.sflag [#allocation3], %s208
          %s210 = sand.u32 %s28, 1
          %s211 = smul.addr %s210, 8
          %s212 = scalar_lea.vmem [#allocation2], %s211
          %s214 = ssub.s32 128, 128
          %215 = vsyncadd %s209, %s214
          %s216 = smul.addr %s18, 128
          %s217 = scalar_lea.hbm %s0, %s216
          %s219 = sshll.u32 %s212, 4
          %s220 = int_to_ptr.vmem [resolvable:$true] %s219
          %222 = dma.hbm_to_vmem [thread:$0]  %s217, 128, %s220, %s209
        $region36: #{tpu_custom_call.1} parent=31 // pred_fallthru
          _
      $region32: #{tpu_custom_call.1} parent=5 // pred_fallthru
        _
      %p223 = scmp.le.s32.totalorder 1, %s18
      %p224 = scmp.lt.s32.totalorder %s18, 3
      %p225 = pnand %p223, %p224
      %p226 = pneg %p225
      // Predicated region
      $region37: #{tpu_custom_call.1} parent=5 // pred_check
        _
      $region38: #{tpu_custom_call.1} parent=5 // pred_check_branch
        %228 = sbr.rel (%p225) target = $region40
      $region39: #{tpu_custom_call.1} parent=5 // pred_region
        %s229 = ssub.s32 %s18, 1
        %s230 = sand.u32 %s31, 1
        %s231 = scalar_lea.sflag [#allocation3], %s230
        %s232 = sand.u32 %s31, 1
        %s233 = smul.addr %s232, 8
        %s234 = scalar_lea.vmem [#allocation2], %s233
        // Predicated region
        $region41: #{tpu_custom_call.1} parent=39 // pred_check
          %p235 = pneg %p44
        $region42: #{tpu_custom_call.1} parent=39 // pred_check_branch
          %237 = sbr.rel (%p235) target = $region44
        $region43: #{tpu_custom_call.1} parent=39 // pred_region
          %238 = dma.done %s231, 128
        $region44: #{tpu_custom_call.1} parent=39 // pred_fallthru
          _
        // Predicated region
        $region45: #{tpu_custom_call.1} parent=39 // pred_check
          %p239 = pneg %p65
        $region46: #{tpu_custom_call.1} parent=39 // pred_check_branch
          %241 = sbr.rel (%p239) target = $region48
        $region47: #{tpu_custom_call.1} parent=39 // pred_region
          %242 = dma.done [#allocation6], 256
        $region48: #{tpu_custom_call.1} parent=39 // pred_fallthru
          _
        // Predicated region
        $region49: #{tpu_custom_call.1} parent=39 // pred_check
          %p243 = pneg %p107
        $region50: #{tpu_custom_call.1} parent=39 // pred_check_branch
          %245 = sbr.rel (%p243) target = $region52
        $region51: #{tpu_custom_call.1} parent=39 // pred_region
          %246 = dma.done [#allocation6], 512
        $region52: #{tpu_custom_call.1} parent=39 // pred_fallthru
          _
        %s247 = sand.u32 %s31, 1
        %s248 = scalar_lea.sflag [#allocation3], %s247
        %s249 = sand.u32 %s31, 1
        %s250 = smul.addr %s249, 8
        %s251 = scalar_lea.vmem [#allocation2], %s250
        %p252 = pneg %p44
        %p253 = pneg %p41
        %p254 = pneg %p65
        %p255 = pneg %p62
        %p256 = pneg %p86
        %p257 = pneg %p83
        %p258 = pneg %p107
        %p259 = pneg %p104
        %p260 = pneg %p128
        %p261 = pneg %p125
        %p262 = pneg %p154
        %p263 = pneg %p151
        %s264 = sand.u32 %s141, 1
        %s265 = scalar_lea.sflag [#allocation4], %s264
        %s266 = sand.u32 %s141, 1
        %s267 = smul.addr %s266, 8
        %s268 = scalar_lea.vmem [#allocation8], %s267
        %v269 = vld [vmem:[%s234] sm:$0xff]
        %v270 = vld [vmem:[#allocation5] sm:$0xff]
        %v271 = vld [vmem:[#allocation5 + $0x8] sm:$0xff]
        %v272 = vld [vmem:[%s2] sm:$0x1]
        %v274 = vlaneseq
        %v275 = vshrl.u32 %v274, 7
        %v276 = vsub.s32 0, %v275
        %v277 = vrot.slane %v272, %v276
        %vm279 = vcmask 130048
        %v281 = vsel %vm279, %v269, 0
        %283 = vmatprep.subr.mxu0 0.0
        %284 = vmatpush1.msra.mxu0 %v270
        %285 = vmatprep.subr.mxu0 0.0
        %286 = vmatpush1.msra.mxu0 %v271
        %287 = vmatprep.subr.mxu0 0.0
        %288 = vmatpush1.msra.mxu0 0.0
        %289 = vmatprep.subr.mxu0 0.0
        %290 = vmatpush1.msra.mxu0 0.0
        %291 = vmatprep.subr.mxu0 0.0
        %292 = vmatpush1.msra.mxu0 0.0
        %293 = vmatprep.subr.mxu0 0.0
        %294 = vmatpush1.msra.mxu0 0.0
        %295 = vmatprep.subr.mxu0 0.0
        %296 = vmatpush1.msra.mxu0 0.0
        %297 = vmatprep.subr.mxu0 0.0
        %298 = vmatpush1.msra.mxu0 0.0
        %299 = vmatprep.subr.mxu0 0.0
        %300 = vmatpush1.msra.mxu0 0.0
        %301 = vmatprep.subr.mxu0 0.0
        %302 = vmatpush1.msra.mxu0 0.0
        %303 = vmatprep.subr.mxu0 0.0
        %304 = vmatpush1.msra.mxu0 0.0
        %305 = vmatprep.subr.mxu0 0.0
        %306 = vmatpush1.msra.mxu0 0.0
        %307 = vmatprep.subr.mxu0 0.0
        %308 = vmatpush1.msra.mxu0 0.0
        %309 = vmatprep.subr.mxu0 0.0
        %310 = vmatpush1.msra.mxu0 0.0
        %311 = vmatprep.subr.mxu0 0.0
        %312 = vmatpush1.msra.mxu0 0.0
        %313 = vmatprep.subr.mxu0 0.0
        %314 = vmatpush1.msra.mxu0 0.0
        %315 = vmatprep.subr.mxu0 0.0
        %316 = vmatpush1.msra.mxu0 0.0
        %317 = vmatprep.subr.mxu0 0.0
        %318 = vmatpush1.msra.mxu0 0.0
        %319 = vmatprep.subr.mxu0 0.0
        %320 = vmatpush1.msra.mxu0 0.0
        %321 = vmatprep.subr.mxu0 0.0
        %322 = vmatpush1.msra.mxu0 0.0
        %323 = vmatprep.subr.mxu0 0.0
        %324 = vmatpush1.msra.mxu0 0.0
        %325 = vmatprep.subr.mxu0 0.0
        %326 = vmatpush1.msra.mxu0 0.0
        %327 = vmatprep.subr.mxu0 0.0
        %328 = vmatpush1.msra.mxu0 0.0
        %329 = vmatprep.subr.mxu0 0.0
        %330 = vmatpush1.msra.mxu0 0.0
        %331 = vmatprep.subr.mxu0 0.0
        %332 = vmatpush1.msra.mxu0 0.0
        %333 = vmatprep.subr.mxu0 0.0
        %334 = vmatpush1.msra.mxu0 0.0
        %335 = vmatprep.subr.mxu0 0.0
        %336 = vmatpush1.msra.mxu0 0.0
        %337 = vmatprep.subr.mxu0 0.0
        %338 = vmatpush1.msra.mxu0 0.0
        %339 = vmatprep.subr.mxu0 0.0
        %340 = vmatpush1.msra.mxu0 0.0
        %341 = vmatprep.subr.mxu0 0.0
        %342 = vmatpush1.msra.mxu0 0.0
        %343 = vmatprep.subr.mxu0 0.0
        %344 = vmatpush1.msra.mxu0 0.0
        %345 = vmatprep.subr.mxu0 0.0
        %346 = vmatpush1.msra.mxu0 0.0
        %347 = vmatprep.mubr.f32.mxu0 0.0
        %348 = vmatmul.mubr.f32.gmra.mrb[0].mxu0 %v281
        %v349 = vpop.f32.mrb[0].mxu0
        %v350 = vadd.f32 %v277, %v349
        %v351 = vpop.f32.mrb[0].mxu0
        %352 = vdwg.mxu0
        %354 = vrot.lane.b32.xlu0 %v350, 120
        %v355 = vpop.permute.xlu0 %354
        %356 = vrot.lane.b32.xlu0 %v350, 112
        %v357 = vpop.permute.xlu0 %356
        %358 = vrot.lane.b32.xlu0 %v350, 104
        %v359 = vpop.permute.xlu0 %358
        %360 = vrot.lane.b32.xlu0 %v350, 96
        %v361 = vpop.permute.xlu0 %360
        %vm362 = vcmask 64512
        %v363 = vsel %vm362, %v350, 0
        %v365 = vsel %vm362, %v361, 0
        %367 = vmatprep.subr.mxu0 0.0
        %368 = vmatpush1.xpose.msra.mxu0 %v365
        %369 = vmatprep.subr.mxu0 0.0
        %370 = vmatpush1.xpose.msra.mxu0 0.0
        %371 = vmatprep.subr.mxu0 0.0
        %372 = vmatpush1.xpose.msra.mxu0 0.0
        %373 = vmatprep.subr.mxu0 0.0
        %374 = vmatpush1.xpose.msra.mxu0 0.0
        %375 = vmatprep.subr.mxu0 0.0
        %376 = vmatpush1.xpose.msra.mxu0 0.0
        %377 = vmatprep.subr.mxu0 0.0
        %378 = vmatpush1.xpose.msra.mxu0 0.0
        %379 = vmatprep.subr.mxu0 0.0
        %380 = vmatpush1.xpose.msra.mxu0 0.0
        %381 = vmatprep.subr.mxu0 0.0
        %382 = vmatpush1.xpose.msra.mxu0 0.0
        %383 = vmatprep.subr.mxu0 0.0
        %384 = vmatpush1.xpose.msra.mxu0 0.0
        %385 = vmatprep.subr.mxu0 0.0
        %386 = vmatpush1.xpose.msra.mxu0 0.0
        %387 = vmatprep.subr.mxu0 0.0
        %388 = vmatpush1.xpose.msra.mxu0 0.0
        %389 = vmatprep.subr.mxu0 0.0
        %390 = vmatpush1.xpose.msra.mxu0 0.0
        %391 = vmatprep.subr.mxu0 0.0
        %392 = vmatpush1.xpose.msra.mxu0 0.0
        %393 = vmatprep.subr.mxu0 0.0
        %394 = vmatpush1.xpose.msra.mxu0 0.0
        %395 = vmatprep.subr.mxu0 0.0
        %396 = vmatpush1.xpose.msra.mxu0 0.0
        %397 = vmatprep.subr.mxu0 0.0
        %398 = vmatpush1.xpose.msra.mxu0 0.0
        %399 = vmatprep.subr.mxu0 0.0
        %400 = vmatpush1.xpose.msra.mxu0 0.0
        %401 = vmatprep.subr.mxu0 0.0
        %402 = vmatpush1.xpose.msra.mxu0 0.0
        %403 = vmatprep.subr.mxu0 0.0
        %404 = vmatpush1.xpose.msra.mxu0 0.0
        %405 = vmatprep.subr.mxu0 0.0
        %406 = vmatpush1.xpose.msra.mxu0 0.0
        %407 = vmatprep.subr.mxu0 0.0
        %408 = vmatpush1.xpose.msra.mxu0 0.0
        %409 = vmatprep.subr.mxu0 0.0
        %410 = vmatpush1.xpose.msra.mxu0 0.0
        %411 = vmatprep.subr.mxu0 0.0
        %412 = vmatpush1.xpose.msra.mxu0 0.0
        %413 = vmatprep.subr.mxu0 0.0
        %414 = vmatpush1.xpose.msra.mxu0 0.0
        %415 = vmatprep.subr.mxu0 0.0
        %416 = vmatpush1.xpose.msra.mxu0 0.0
        %417 = vmatprep.subr.mxu0 0.0
        %418 = vmatpush1.xpose.msra.mxu0 0.0
        %419 = vmatprep.subr.mxu0 0.0
        %420 = vmatpush1.xpose.msra.mxu0 0.0
        %421 = vmatprep.subr.mxu0 0.0
        %422 = vmatpush1.xpose.msra.mxu0 0.0
        %423 = vmatprep.subr.mxu0 0.0
        %424 = vmatpush1.xpose.msra.mxu0 0.0
        %425 = vmatprep.subr.mxu0 0.0
        %426 = vmatpush1.xpose.msra.mxu0 0.0
        %427 = vmatprep.subr.mxu0 0.0
        %428 = vmatpush1.xpose.msra.mxu0 0.0
        %429 = vmatprep.subr.mxu0 0.0
        %430 = vmatpush1.xpose.msra.mxu0 0.0
        %431 = vmatprep.mubr.f32.mxu0 0.0
        %432 = vmatmul.mubr.f32.gmra.mrb[0].mxu0 %v363
        %v433 = vpop.f32.mrb[0].mxu0
        %v434 = vadd.f32 0.0, %v433
        %v435 = vpop.f32.mrb[0].mxu0
        %436 = vdwg.mxu0
        %437 = vrot.lane.b32.xlu0 %v355, 96
        %v438 = vpop.permute.xlu0 %437
        %v439 = vsel %vm362, %v355, 0
        %v441 = vsel %vm362, %v438, 0
        %443 = vmatprep.subr.mxu0 0.0
        %444 = vmatpush1.xpose.msra.mxu0 %v441
        %445 = vmatprep.subr.mxu0 0.0
        %446 = vmatpush1.xpose.msra.mxu0 0.0
        %447 = vmatprep.subr.mxu0 0.0
        %448 = vmatpush1.xpose.msra.mxu0 0.0
        %449 = vmatprep.subr.mxu0 0.0
        %450 = vmatpush1.xpose.msra.mxu0 0.0
        %451 = vmatprep.subr.mxu0 0.0
        %452 = vmatpush1.xpose.msra.mxu0 0.0
        %453 = vmatprep.subr.mxu0 0.0
        %454 = vmatpush1.xpose.msra.mxu0 0.0
        %455 = vmatprep.subr.mxu0 0.0
        %456 = vmatpush1.xpose.msra.mxu0 0.0
        %457 = vmatprep.subr.mxu0 0.0
        %458 = vmatpush1.xpose.msra.mxu0 0.0
        %459 = vmatprep.subr.mxu0 0.0
        %460 = vmatpush1.xpose.msra.mxu0 0.0
        %461 = vmatprep.subr.mxu0 0.0
        %462 = vmatpush1.xpose.msra.mxu0 0.0
        %463 = vmatprep.subr.mxu0 0.0
        %464 = vmatpush1.xpose.msra.mxu0 0.0
        %465 = vmatprep.subr.mxu0 0.0
        %466 = vmatpush1.xpose.msra.mxu0 0.0
        %467 = vmatprep.subr.mxu0 0.0
        %468 = vmatpush1.xpose.msra.mxu0 0.0
        %469 = vmatprep.subr.mxu0 0.0
        %470 = vmatpush1.xpose.msra.mxu0 0.0
        %471 = vmatprep.subr.mxu0 0.0
        %472 = vmatpush1.xpose.msra.mxu0 0.0
        %473 = vmatprep.subr.mxu0 0.0
        %474 = vmatpush1.xpose.msra.mxu0 0.0
        %475 = vmatprep.subr.mxu0 0.0
        %476 = vmatpush1.xpose.msra.mxu0 0.0
        %477 = vmatprep.subr.mxu0 0.0
        %478 = vmatpush1.xpose.msra.mxu0 0.0
        %479 = vmatprep.subr.mxu0 0.0
        %480 = vmatpush1.xpose.msra.mxu0 0.0
        %481 = vmatprep.subr.mxu0 0.0
        %482 = vmatpush1.xpose.msra.mxu0 0.0
        %483 = vmatprep.subr.mxu0 0.0
        %484 = vmatpush1.xpose.msra.mxu0 0.0
        %485 = vmatprep.subr.mxu0 0.0
        %486 = vmatpush1.xpose.msra.mxu0 0.0
        %487 = vmatprep.subr.mxu0 0.0
        %488 = vmatpush1.xpose.msra.mxu0 0.0
        %489 = vmatprep.subr.mxu0 0.0
        %490 = vmatpush1.xpose.msra.mxu0 0.0
        %491 = vmatprep.subr.mxu0 0.0
        %492 = vmatpush1.xpose.msra.mxu0 0.0
        %493 = vmatprep.subr.mxu0 0.0
        %494 = vmatpush1.xpose.msra.mxu0 0.0
        %495 = vmatprep.subr.mxu0 0.0
        %496 = vmatpush1.xpose.msra.mxu0 0.0
        %497 = vmatprep.subr.mxu0 0.0
        %498 = vmatpush1.xpose.msra.mxu0 0.0
        %499 = vmatprep.subr.mxu0 0.0
        %500 = vmatpush1.xpose.msra.mxu0 0.0
        %501 = vmatprep.subr.mxu0 0.0
        %502 = vmatpush1.xpose.msra.mxu0 0.0
        %503 = vmatprep.subr.mxu0 0.0
        %504 = vmatpush1.xpose.msra.mxu0 0.0
        %505 = vmatprep.subr.mxu0 0.0
        %506 = vmatpush1.xpose.msra.mxu0 0.0
        %507 = vmatprep.mubr.f32.mxu0 0.0
        %508 = vmatmul.mubr.f32.gmra.mrb[0].mxu0 %v439
        %v509 = vpop.f32.mrb[0].mxu0
        %v510 = vadd.f32 0.0, %v509
        %v511 = vpop.f32.mrb[0].mxu0
        %512 = vdwg.mxu0
        %513 = vrot.lane.b32.xlu0 %v357, 96
        %v514 = vpop.permute.xlu0 %513
        %v515 = vsel %vm362, %v357, 0
        %v517 = vsel %vm362, %v514, 0
        %519 = vmatprep.subr.mxu0 0.0
        %520 = vmatpush1.xpose.msra.mxu0 %v517
        %521 = vmatprep.subr.mxu0 0.0
        %522 = vmatpush1.xpose.msra.mxu0 0.0
        %523 = vmatprep.subr.mxu0 0.0
        %524 = vmatpush1.xpose.msra.mxu0 0.0
        %525 = vmatprep.subr.mxu0 0.0
        %526 = vmatpush1.xpose.msra.mxu0 0.0
        %527 = vmatprep.subr.mxu0 0.0
        %528 = vmatpush1.xpose.msra.mxu0 0.0
        %529 = vmatprep.subr.mxu0 0.0
        %530 = vmatpush1.xpose.msra.mxu0 0.0
        %531 = vmatprep.subr.mxu0 0.0
        %532 = vmatpush1.xpose.msra.mxu0 0.0
        %533 = vmatprep.subr.mxu0 0.0
        %534 = vmatpush1.xpose.msra.mxu0 0.0
        %535 = vmatprep.subr.mxu0 0.0
        %536 = vmatpush1.xpose.msra.mxu0 0.0
        %537 = vmatprep.subr.mxu0 0.0
        %538 = vmatpush1.xpose.msra.mxu0 0.0
        %539 = vmatprep.subr.mxu0 0.0
        %540 = vmatpush1.xpose.msra.mxu0 0.0
        %541 = vmatprep.subr.mxu0 0.0
        %542 = vmatpush1.xpose.msra.mxu0 0.0
        %543 = vmatprep.subr.mxu0 0.0
        %544 = vmatpush1.xpose.msra.mxu0 0.0
        %545 = vmatprep.subr.mxu0 0.0
        %546 = vmatpush1.xpose.msra.mxu0 0.0
        %547 = vmatprep.subr.mxu0 0.0
        %548 = vmatpush1.xpose.msra.mxu0 0.0
        %549 = vmatprep.subr.mxu0 0.0
        %550 = vmatpush1.xpose.msra.mxu0 0.0
        %551 = vmatprep.subr.mxu0 0.0
        %552 = vmatpush1.xpose.msra.mxu0 0.0
        %553 = vmatprep.subr.mxu0 0.0
        %554 = vmatpush1.xpose.msra.mxu0 0.0
        %555 = vmatprep.subr.mxu0 0.0
        %556 = vmatpush1.xpose.msra.mxu0 0.0
        %557 = vmatprep.subr.mxu0 0.0
        %558 = vmatpush1.xpose.msra.mxu0 0.0
        %559 = vmatprep.subr.mxu0 0.0
        %560 = vmatpush1.xpose.msra.mxu0 0.0
        %561 = vmatprep.subr.mxu0 0.0
        %562 = vmatpush1.xpose.msra.mxu0 0.0
        %563 = vmatprep.subr.mxu0 0.0
        %564 = vmatpush1.xpose.msra.mxu0 0.0
        %565 = vmatprep.subr.mxu0 0.0
        %566 = vmatpush1.xpose.msra.mxu0 0.0
        %567 = vmatprep.subr.mxu0 0.0
        %568 = vmatpush1.xpose.msra.mxu0 0.0
        %569 = vmatprep.subr.mxu0 0.0
        %570 = vmatpush1.xpose.msra.mxu0 0.0
        %571 = vmatprep.subr.mxu0 0.0
        %572 = vmatpush1.xpose.msra.mxu0 0.0
        %573 = vmatprep.subr.mxu0 0.0
        %574 = vmatpush1.xpose.msra.mxu0 0.0
        %575 = vmatprep.subr.mxu0 0.0
        %576 = vmatpush1.xpose.msra.mxu0 0.0
        %577 = vmatprep.subr.mxu0 0.0
        %578 = vmatpush1.xpose.msra.mxu0 0.0
        %579 = vmatprep.subr.mxu0 0.0
        %580 = vmatpush1.xpose.msra.mxu0 0.0
        %581 = vmatprep.subr.mxu0 0.0
        %582 = vmatpush1.xpose.msra.mxu0 0.0
        %583 = vmatprep.mubr.f32.mxu0 0.0
        %584 = vmatmul.mubr.f32.gmra.mrb[0].mxu0 %v515
        %v585 = vpop.f32.mrb[0].mxu0
        %v586 = vadd.f32 0.0, %v585
        %v587 = vpop.f32.mrb[0].mxu0
        %588 = vdwg.mxu0
        %589 = vrot.lane.b32.xlu0 %v359, 96
        %v590 = vpop.permute.xlu0 %589
        %v591 = vsel %vm362, %v359, 0
        %v593 = vsel %vm362, %v590, 0
        %595 = vmatprep.subr.mxu0 0.0
        %596 = vmatpush1.xpose.msra.mxu0 %v593
        %597 = vmatprep.subr.mxu0 0.0
        %598 = vmatpush1.xpose.msra.mxu0 0.0
        %599 = vmatprep.subr.mxu0 0.0
        %600 = vmatpush1.xpose.msra.mxu0 0.0
        %601 = vmatprep.subr.mxu0 0.0
        %602 = vmatpush1.xpose.msra.mxu0 0.0
        %603 = vmatprep.subr.mxu0 0.0
        %604 = vmatpush1.xpose.msra.mxu0 0.0
        %605 = vmatprep.subr.mxu0 0.0
        %606 = vmatpush1.xpose.msra.mxu0 0.0
        %607 = vmatprep.subr.mxu0 0.0
        %608 = vmatpush1.xpose.msra.mxu0 0.0
        %609 = vmatprep.subr.mxu0 0.0
        %610 = vmatpush1.xpose.msra.mxu0 0.0
        %611 = vmatprep.subr.mxu0 0.0
        %612 = vmatpush1.xpose.msra.mxu0 0.0
        %613 = vmatprep.subr.mxu0 0.0
        %614 = vmatpush1.xpose.msra.mxu0 0.0
        %615 = vmatprep.subr.mxu0 0.0
        %616 = vmatpush1.xpose.msra.mxu0 0.0
        %617 = vmatprep.subr.mxu0 0.0
        %618 = vmatpush1.xpose.msra.mxu0 0.0
        %619 = vmatprep.subr.mxu0 0.0
        %620 = vmatpush1.xpose.msra.mxu0 0.0
        %621 = vmatprep.subr.mxu0 0.0
        %622 = vmatpush1.xpose.msra.mxu0 0.0
        %623 = vmatprep.subr.mxu0 0.0
        %624 = vmatpush1.xpose.msra.mxu0 0.0
        %625 = vmatprep.subr.mxu0 0.0
        %626 = vmatpush1.xpose.msra.mxu0 0.0
        %627 = vmatprep.subr.mxu0 0.0
        %628 = vmatpush1.xpose.msra.mxu0 0.0
        %629 = vmatprep.subr.mxu0 0.0
        %630 = vmatpush1.xpose.msra.mxu0 0.0
        %631 = vmatprep.subr.mxu0 0.0
        %632 = vmatpush1.xpose.msra.mxu0 0.0
        %633 = vmatprep.subr.mxu0 0.0
        %634 = vmatpush1.xpose.msra.mxu0 0.0
        %635 = vmatprep.subr.mxu0 0.0
        %636 = vmatpush1.xpose.msra.mxu0 0.0
        %637 = vmatprep.subr.mxu0 0.0
        %638 = vmatpush1.xpose.msra.mxu0 0.0
        %639 = vmatprep.subr.mxu0 0.0
        %640 = vmatpush1.xpose.msra.mxu0 0.0
        %641 = vmatprep.subr.mxu0 0.0
        %642 = vmatpush1.xpose.msra.mxu0 0.0
        %643 = vmatprep.subr.mxu0 0.0
        %644 = vmatpush1.xpose.msra.mxu0 0.0
        %645 = vmatprep.subr.mxu0 0.0
        %646 = vmatpush1.xpose.msra.mxu0 0.0
        %647 = vmatprep.subr.mxu0 0.0
        %648 = vmatpush1.xpose.msra.mxu0 0.0
        %649 = vmatprep.subr.mxu0 0.0
        %650 = vmatpush1.xpose.msra.mxu0 0.0
        %651 = vmatprep.subr.mxu0 0.0
        %652 = vmatpush1.xpose.msra.mxu0 0.0
        %653 = vmatprep.subr.mxu0 0.0
        %654 = vmatpush1.xpose.msra.mxu0 0.0
        %655 = vmatprep.subr.mxu0 0.0
        %656 = vmatpush1.xpose.msra.mxu0 0.0
        %657 = vmatprep.subr.mxu0 0.0
        %658 = vmatpush1.xpose.msra.mxu0 0.0
        %659 = vmatprep.mubr.f32.mxu0 0.0
        %660 = vmatmul.mubr.f32.gmra.mrb[0].mxu0 %v591
        %v661 = vpop.f32.mrb[0].mxu0
        %v662 = vadd.f32 0.0, %v661
        %v663 = vpop.f32.mrb[0].mxu0
        %664 = vdwg.mxu0
        %v665 = vmul.f32 %v434, 0.35355338
        %v666 = vmul.f32 %v510, 0.35355338
        %v667 = vmul.f32 %v586, 0.35355338
        %v668 = vmul.f32 %v662, 0.35355338
        %v669 = vsel %vm362, %v665, -inf
        %670 = vmax.xlane.f32.xlu0 %v669
        %v671 = vpop.xlane.xlu0 %670
        %v672 = vsel %vm362, %v666, -inf
        %673 = vmax.xlane.f32.xlu0 %v672
        %v674 = vpop.xlane.xlu0 %673
        %v675 = vsel %vm362, %v667, -inf
        %676 = vmax.xlane.f32.xlu0 %v675
        %v677 = vpop.xlane.xlu0 %676
        %v678 = vsel %vm362, %v668, -inf
        %679 = vmax.xlane.f32.xlu0 %v678
        %v680 = vpop.xlane.xlu0 %679
        %v681 = vsub.f32 %v665, %v671
        %v682 = vsub.f32 %v666, %v674
        %v683 = vsub.f32 %v667, %v677
        %v684 = vsub.f32 %v668, %v680
        %v685 = vmul.f32 %v681, 1.442695
        %v686 = vpow.pop %v685
        %v687 = vmul.f32 %v682, 1.442695
        %v688 = vpow.pop %v687
        %v689 = vmul.f32 %v683, 1.442695
        %v690 = vpow.pop %v689
        %v691 = vmul.f32 %v684, 1.442695
        %v692 = vpow.pop %v691
        %v693 = vsel %vm362, %v686, 0.0
        %694 = vadd.xlane.f32.xlu0 %v693
        %v695 = vpop.xlane.xlu0 %694
        %v696 = vsel %vm362, %v688, 0.0
        %697 = vadd.xlane.f32.xlu0 %v696
        %v698 = vpop.xlane.xlu0 %697
        %v699 = vsel %vm362, %v690, 0.0
        %700 = vadd.xlane.f32.xlu0 %v699
        %v701 = vpop.xlane.xlu0 %700
        %v702 = vsel %vm362, %v692, 0.0
        %703 = vadd.xlane.f32.xlu0 %v702
        %v704 = vpop.xlane.xlu0 %703
        %v705 = vrcp.pop %v695
        %v706 = vrcp.pop %v698
        %v707 = vrcp.pop %v701
        %v708 = vrcp.pop %v704
        %v709 = vmul.f32 %v686, %v705
        %v710 = vmul.f32 %v688, %v706
        %v711 = vmul.f32 %v690, %v707
        %v712 = vmul.f32 %v692, %v708
        %713 = vrot.lane.b32.xlu0 %v350, 64
        %v714 = vpop.permute.xlu0 %713
        %v717 = vsel %vm362, %v709, 0
        %719 = vmatprep.subr.mxu0 0.0
        %720 = vmatpush1.msra.mxu0 %v714
        %721 = vmatprep.subr.mxu0 0.0
        %722 = vmatpush1.msra.mxu0 0.0
        %723 = vmatprep.subr.mxu0 0.0
        %724 = vmatpush1.msra.mxu0 0.0
        %725 = vmatprep.subr.mxu0 0.0
        %726 = vmatpush1.msra.mxu0 0.0
        %727 = vmatprep.subr.mxu0 0.0
        %728 = vmatpush1.msra.mxu0 0.0
        %729 = vmatprep.subr.mxu0 0.0
        %730 = vmatpush1.msra.mxu0 0.0
        %731 = vmatprep.subr.mxu0 0.0
        %732 = vmatpush1.msra.mxu0 0.0
        %733 = vmatprep.subr.mxu0 0.0
        %734 = vmatpush1.msra.mxu0 0.0
        %735 = vmatprep.subr.mxu0 0.0
        %736 = vmatpush1.msra.mxu0 0.0
        %737 = vmatprep.subr.mxu0 0.0
        %738 = vmatpush1.msra.mxu0 0.0
        %739 = vmatprep.subr.mxu0 0.0
        %740 = vmatpush1.msra.mxu0 0.0
        %741 = vmatprep.subr.mxu0 0.0
        %742 = vmatpush1.msra.mxu0 0.0
        %743 = vmatprep.subr.mxu0 0.0
        %744 = vmatpush1.msra.mxu0 0.0
        %745 = vmatprep.subr.mxu0 0.0
        %746 = vmatpush1.msra.mxu0 0.0
        %747 = vmatprep.subr.mxu0 0.0
        %748 = vmatpush1.msra.mxu0 0.0
        %749 = vmatprep.subr.mxu0 0.0
        %750 = vmatpush1.msra.mxu0 0.0
        %751 = vmatprep.subr.mxu0 0.0
        %752 = vmatpush1.msra.mxu0 0.0
        %753 = vmatprep.subr.mxu0 0.0
        %754 = vmatpush1.msra.mxu0 0.0
        %755 = vmatprep.subr.mxu0 0.0
        %756 = vmatpush1.msra.mxu0 0.0
        %757 = vmatprep.subr.mxu0 0.0
        %758 = vmatpush1.msra.mxu0 0.0
        %759 = vmatprep.subr.mxu0 0.0
        %760 = vmatpush1.msra.mxu0 0.0
        %761 = vmatprep.subr.mxu0 0.0
        %762 = vmatpush1.msra.mxu0 0.0
        %763 = vmatprep.subr.mxu0 0.0
        %764 = vmatpush1.msra.mxu0 0.0
        %765 = vmatprep.subr.mxu0 0.0
        %766 = vmatpush1.msra.mxu0 0.0
        %767 = vmatprep.subr.mxu0 0.0
        %768 = vmatpush1.msra.mxu0 0.0
        %769 = vmatprep.subr.mxu0 0.0
        %770 = vmatpush1.msra.mxu0 0.0
        %771 = vmatprep.subr.mxu0 0.0
        %772 = vmatpush1.msra.mxu0 0.0
        %773 = vmatprep.subr.mxu0 0.0
        %774 = vmatpush1.msra.mxu0 0.0
        %775 = vmatprep.subr.mxu0 0.0
        %776 = vmatpush1.msra.mxu0 0.0
        %777 = vmatprep.subr.mxu0 0.0
        %778 = vmatpush1.msra.mxu0 0.0
        %779 = vmatprep.subr.mxu0 0.0
        %780 = vmatpush1.msra.mxu0 0.0
        %781 = vmatprep.subr.mxu0 0.0
        %782 = vmatpush1.msra.mxu0 0.0
        %783 = vmatprep.mubr.f32.mxu0 0.0
        %784 = vmatmul.mubr.f32.gmra.mrb[0].mxu0 %v717
        %v785 = vpop.f32.mrb[0].mxu0
        %v786 = vadd.f32 0.0, %v785
        %v787 = vpop.f32.mrb[0].mxu0
        %788 = vdwg.mxu0
        %789 = vrot.lane.b32.xlu0 %v355, 64
        %v790 = vpop.permute.xlu0 %789
        %v793 = vsel %vm362, %v710, 0
        %795 = vmatprep.subr.mxu0 0.0
        %796 = vmatpush1.msra.mxu0 %v790
        %797 = vmatprep.subr.mxu0 0.0
        %798 = vmatpush1.msra.mxu0 0.0
        %799 = vmatprep.subr.mxu0 0.0
        %800 = vmatpush1.msra.mxu0 0.0
        %801 = vmatprep.subr.mxu0 0.0
        %802 = vmatpush1.msra.mxu0 0.0
        %803 = vmatprep.subr.mxu0 0.0
        %804 = vmatpush1.msra.mxu0 0.0
        %805 = vmatprep.subr.mxu0 0.0
        %806 = vmatpush1.msra.mxu0 0.0
        %807 = vmatprep.subr.mxu0 0.0
        %808 = vmatpush1.msra.mxu0 0.0
        %809 = vmatprep.subr.mxu0 0.0
        %810 = vmatpush1.msra.mxu0 0.0
        %811 = vmatprep.subr.mxu0 0.0
        %812 = vmatpush1.msra.mxu0 0.0
        %813 = vmatprep.subr.mxu0 0.0
        %814 = vmatpush1.msra.mxu0 0.0
        %815 = vmatprep.subr.mxu0 0.0
        %816 = vmatpush1.msra.mxu0 0.0
        %817 = vmatprep.subr.mxu0 0.0
        %818 = vmatpush1.msra.mxu0 0.0
        %819 = vmatprep.subr.mxu0 0.0
        %820 = vmatpush1.msra.mxu0 0.0
        %821 = vmatprep.subr.mxu0 0.0
        %822 = vmatpush1.msra.mxu0 0.0
        %823 = vmatprep.subr.mxu0 0.0
        %824 = vmatpush1.msra.mxu0 0.0
        %825 = vmatprep.subr.mxu0 0.0
        %826 = vmatpush1.msra.mxu0 0.0
        %827 = vmatprep.subr.mxu0 0.0
        %828 = vmatpush1.msra.mxu0 0.0
        %829 = vmatprep.subr.mxu0 0.0
        %830 = vmatpush1.msra.mxu0 0.0
        %831 = vmatprep.subr.mxu0 0.0
        %832 = vmatpush1.msra.mxu0 0.0
        %833 = vmatprep.subr.mxu0 0.0
        %834 = vmatpush1.msra.mxu0 0.0
        %835 = vmatprep.subr.mxu0 0.0
        %836 = vmatpush1.msra.mxu0 0.0
        %837 = vmatprep.subr.mxu0 0.0
        %838 = vmatpush1.msra.mxu0 0.0
        %839 = vmatprep.subr.mxu0 0.0
        %840 = vmatpush1.msra.mxu0 0.0
        %841 = vmatprep.subr.mxu0 0.0
        %842 = vmatpush1.msra.mxu0 0.0
        %843 = vmatprep.subr.mxu0 0.0
        %844 = vmatpush1.msra.mxu0 0.0
        %845 = vmatprep.subr.mxu0 0.0
        %846 = vmatpush1.msra.mxu0 0.0
        %847 = vmatprep.subr.mxu0 0.0
        %848 = vmatpush1.msra.mxu0 0.0
        %849 = vmatprep.subr.mxu0 0.0
        %850 = vmatpush1.msra.mxu0 0.0
        %851 = vmatprep.subr.mxu0 0.0
        %852 = vmatpush1.msra.mxu0 0.0
        %853 = vmatprep.subr.mxu0 0.0
        %854 = vmatpush1.msra.mxu0 0.0
        %855 = vmatprep.subr.mxu0 0.0
        %856 = vmatpush1.msra.mxu0 0.0
        %857 = vmatprep.subr.mxu0 0.0
        %858 = vmatpush1.msra.mxu0 0.0
        %859 = vmatprep.mubr.f32.mxu0 0.0
        %860 = vmatmul.mubr.f32.gmra.mrb[0].mxu0 %v793
        %v861 = vpop.f32.mrb[0].mxu0
        %v862 = vadd.f32 0.0, %v861
        %v863 = vpop.f32.mrb[0].mxu0
        %864 = vdwg.mxu0
        %865 = vrot.lane.b32.xlu0 %v357, 64
        %v866 = vpop.permute.xlu0 %865
        %v869 = vsel %vm362, %v711, 0
        %871 = vmatprep.subr.mxu0 0.0
        %872 = vmatpush1.msra.mxu0 %v866
        %873 = vmatprep.subr.mxu0 0.0
        %874 = vmatpush1.msra.mxu0 0.0
        %875 = vmatprep.subr.mxu0 0.0
        %876 = vmatpush1.msra.mxu0 0.0
        %877 = vmatprep.subr.mxu0 0.0
        %878 = vmatpush1.msra.mxu0 0.0
        %879 = vmatprep.subr.mxu0 0.0
        %880 = vmatpush1.msra.mxu0 0.0
        %881 = vmatprep.subr.mxu0 0.0
        %882 = vmatpush1.msra.mxu0 0.0
        %883 = vmatprep.subr.mxu0 0.0
        %884 = vmatpush1.msra.mxu0 0.0
        %885 = vmatprep.subr.mxu0 0.0
        %886 = vmatpush1.msra.mxu0 0.0
        %887 = vmatprep.subr.mxu0 0.0
        %888 = vmatpush1.msra.mxu0 0.0
        %889 = vmatprep.subr.mxu0 0.0
        %890 = vmatpush1.msra.mxu0 0.0
        %891 = vmatprep.subr.mxu0 0.0
        %892 = vmatpush1.msra.mxu0 0.0
        %893 = vmatprep.subr.mxu0 0.0
        %894 = vmatpush1.msra.mxu0 0.0
        %895 = vmatprep.subr.mxu0 0.0
        %896 = vmatpush1.msra.mxu0 0.0
        %897 = vmatprep.subr.mxu0 0.0
        %898 = vmatpush1.msra.mxu0 0.0
        %899 = vmatprep.subr.mxu0 0.0
        %900 = vmatpush1.msra.mxu0 0.0
        %901 = vmatprep.subr.mxu0 0.0
        %902 = vmatpush1.msra.mxu0 0.0
        %903 = vmatprep.subr.mxu0 0.0
        %904 = vmatpush1.msra.mxu0 0.0
        %905 = vmatprep.subr.mxu0 0.0
        %906 = vmatpush1.msra.mxu0 0.0
        %907 = vmatprep.subr.mxu0 0.0
        %908 = vmatpush1.msra.mxu0 0.0
        %909 = vmatprep.subr.mxu0 0.0
        %910 = vmatpush1.msra.mxu0 0.0
        %911 = vmatprep.subr.mxu0 0.0
        %912 = vmatpush1.msra.mxu0 0.0
        %913 = vmatprep.subr.mxu0 0.0
        %914 = vmatpush1.msra.mxu0 0.0
        %915 = vmatprep.subr.mxu0 0.0
        %916 = vmatpush1.msra.mxu0 0.0
        %917 = vmatprep.subr.mxu0 0.0
        %918 = vmatpush1.msra.mxu0 0.0
        %919 = vmatprep.subr.mxu0 0.0
        %920 = vmatpush1.msra.mxu0 0.0
        %921 = vmatprep.subr.mxu0 0.0
        %922 = vmatpush1.msra.mxu0 0.0
        %923 = vmatprep.subr.mxu0 0.0
        %924 = vmatpush1.msra.mxu0 0.0
        %925 = vmatprep.subr.mxu0 0.0
        %926 = vmatpush1.msra.mxu0 0.0
        %927 = vmatprep.subr.mxu0 0.0
        %928 = vmatpush1.msra.mxu0 0.0
        %929 = vmatprep.subr.mxu0 0.0
        %930 = vmatpush1.msra.mxu0 0.0
        %931 = vmatprep.subr.mxu0 0.0
        %932 = vmatpush1.msra.mxu0 0.0
        %933 = vmatprep.subr.mxu0 0.0
        %934 = vmatpush1.msra.mxu0 0.0
        %935 = vmatprep.mubr.f32.mxu0 0.0
        %936 = vmatmul.mubr.f32.gmra.mrb[0].mxu0 %v869
        %v937 = vpop.f32.mrb[0].mxu0
        %v938 = vadd.f32 0.0, %v937
        %v939 = vpop.f32.mrb[0].mxu0
        %940 = vdwg.mxu0
        %941 = vrot.lane.b32.xlu0 %v359, 64
        %v942 = vpop.permute.xlu0 %941
        %v945 = vsel %vm362, %v712, 0
        %947 = vmatprep.subr.mxu0 0.0
        %948 = vmatpush1.msra.mxu0 %v942
        %949 = vmatprep.subr.mxu0 0.0
        %950 = vmatpush1.msra.mxu0 0.0
        %951 = vmatprep.subr.mxu0 0.0
        %952 = vmatpush1.msra.mxu0 0.0
        %953 = vmatprep.subr.mxu0 0.0
        %954 = vmatpush1.msra.mxu0 0.0
        %955 = vmatprep.subr.mxu0 0.0
        %956 = vmatpush1.msra.mxu0 0.0
        %957 = vmatprep.subr.mxu0 0.0
        %958 = vmatpush1.msra.mxu0 0.0
        %959 = vmatprep.subr.mxu0 0.0
        %960 = vmatpush1.msra.mxu0 0.0
        %961 = vmatprep.subr.mxu0 0.0
        %962 = vmatpush1.msra.mxu0 0.0
        %963 = vmatprep.subr.mxu0 0.0
        %964 = vmatpush1.msra.mxu0 0.0
        %965 = vmatprep.subr.mxu0 0.0
        %966 = vmatpush1.msra.mxu0 0.0
        %967 = vmatprep.subr.mxu0 0.0
        %968 = vmatpush1.msra.mxu0 0.0
        %969 = vmatprep.subr.mxu0 0.0
        %970 = vmatpush1.msra.mxu0 0.0
        %971 = vmatprep.subr.mxu0 0.0
        %972 = vmatpush1.msra.mxu0 0.0
        %973 = vmatprep.subr.mxu0 0.0
        %974 = vmatpush1.msra.mxu0 0.0
        %975 = vmatprep.subr.mxu0 0.0
        %976 = vmatpush1.msra.mxu0 0.0
        %977 = vmatprep.subr.mxu0 0.0
        %978 = vmatpush1.msra.mxu0 0.0
        %979 = vmatprep.subr.mxu0 0.0
        %980 = vmatpush1.msra.mxu0 0.0
        %981 = vmatprep.subr.mxu0 0.0
        %982 = vmatpush1.msra.mxu0 0.0
        %983 = vmatprep.subr.mxu0 0.0
        %984 = vmatpush1.msra.mxu0 0.0
        %985 = vmatprep.subr.mxu0 0.0
        %986 = vmatpush1.msra.mxu0 0.0
        %987 = vmatprep.subr.mxu0 0.0
        %988 = vmatpush1.msra.mxu0 0.0
        %989 = vmatprep.subr.mxu0 0.0
        %990 = vmatpush1.msra.mxu0 0.0
        %991 = vmatprep.subr.mxu0 0.0
        %992 = vmatpush1.msra.mxu0 0.0
        %993 = vmatprep.subr.mxu0 0.0
        %994 = vmatpush1.msra.mxu0 0.0
        %995 = vmatprep.subr.mxu0 0.0
        %996 = vmatpush1.msra.mxu0 0.0
        %997 = vmatprep.subr.mxu0 0.0
        %998 = vmatpush1.msra.mxu0 0.0
        %999 = vmatprep.subr.mxu0 0.0
        %1000 = vmatpush1.msra.mxu0 0.0
        %1001 = vmatprep.subr.mxu0 0.0
        %1002 = vmatpush1.msra.mxu0 0.0
        %1003 = vmatprep.subr.mxu0 0.0
        %1004 = vmatpush1.msra.mxu0 0.0
        %1005 = vmatprep.subr.mxu0 0.0
        %1006 = vmatpush1.msra.mxu0 0.0
        %1007 = vmatprep.subr.mxu0 0.0
        %1008 = vmatpush1.msra.mxu0 0.0
        %1009 = vmatprep.subr.mxu0 0.0
        %1010 = vmatpush1.msra.mxu0 0.0
        %1011 = vmatprep.mubr.f32.mxu0 0.0
        %1012 = vmatmul.mubr.f32.gmra.mrb[0].mxu0 %v945
        %v1013 = vpop.f32.mrb[0].mxu0
        %v1014 = vadd.f32 0.0, %v1013
        %v1015 = vpop.f32.mrb[0].mxu0
        %1016 = vdwg.mxu0
        %1018 = vrot.lane.b32.xlu0 %v862, 8
        %v1019 = vpop.permute.xlu0 %1018
        %1022 = vrot.lane.b32.xlu0 %v938, 16
        %v1023 = vpop.permute.xlu0 %1022
        %1026 = vrot.lane.b32.xlu0 %v1014, 24
        %v1027 = vpop.permute.xlu0 %1026
        %v1029 = vsel %vm362, %v786, %v1019
        %v1030 = vsel %vm279, %v1029, %v1023
        %vm1031 = vcmask 195584
        %v1032 = vsel %vm1031, %v1030, %v1027
        %v1033 = vld [vmem:[#allocation7] sm:$0xff]
        %v1034 = vld [vmem:[#allocation7 + $0x8] sm:$0xff]
        %v1035 = vld [vmem:[#allocation7 + $0x10] sm:$0xff]
        %v1036 = vld [vmem:[#allocation7 + $0x18] sm:$0xff]
        %v1037 = vld [vmem:[%s4] sm:$0x1]
        %v1039 = vlaneseq
        %v1040 = vshrl.u32 %v1039, 7
        %v1041 = vsub.s32 0, %v1040
        %v1042 = vrot.slane %v1037, %v1041
        %vm1044 = vcmask 261120
        %v1046 = vsel %vm1044, %v1032, 0
        %1048 = vmatprep.subr.mxu0 0.0
        %1049 = vmatpush1.msra.mxu0 %v1033
        %1050 = vmatprep.subr.mxu0 0.0
        %1051 = vmatpush1.msra.mxu0 %v1034
        %1052 = vmatprep.subr.mxu0 0.0
        %1053 = vmatpush1.msra.mxu0 %v1035
        %1054 = vmatprep.subr.mxu0 0.0
        %1055 = vmatpush1.msra.mxu0 %v1036
        %1056 = vmatprep.subr.mxu0 0.0
        %1057 = vmatpush1.msra.mxu0 0.0
        %1058 = vmatprep.subr.mxu0 0.0
        %1059 = vmatpush1.msra.mxu0 0.0
        %1060 = vmatprep.subr.mxu0 0.0
        %1061 = vmatpush1.msra.mxu0 0.0
        %1062 = vmatprep.subr.mxu0 0.0
        %1063 = vmatpush1.msra.mxu0 0.0
        %1064 = vmatprep.subr.mxu0 0.0
        %1065 = vmatpush1.msra.mxu0 0.0
        %1066 = vmatprep.subr.mxu0 0.0
        %1067 = vmatpush1.msra.mxu0 0.0
        %1068 = vmatprep.subr.mxu0 0.0
        %1069 = vmatpush1.msra.mxu0 0.0
        %1070 = vmatprep.subr.mxu0 0.0
        %1071 = vmatpush1.msra.mxu0 0.0
        %1072 = vmatprep.subr.mxu0 0.0
        %1073 = vmatpush1.msra.mxu0 0.0
        %1074 = vmatprep.subr.mxu0 0.0
        %1075 = vmatpush1.msra.mxu0 0.0
        %1076 = vmatprep.subr.mxu0 0.0
        %1077 = vmatpush1.msra.mxu0 0.0
        %1078 = vmatprep.subr.mxu0 0.0
        %1079 = vmatpush1.msra.mxu0 0.0
        %1080 = vmatprep.subr.mxu0 0.0
        %1081 = vmatpush1.msra.mxu0 0.0
        %1082 = vmatprep.subr.mxu0 0.0
        %1083 = vmatpush1.msra.mxu0 0.0
        %1084 = vmatprep.subr.mxu0 0.0
        %1085 = vmatpush1.msra.mxu0 0.0
        %1086 = vmatprep.subr.mxu0 0.0
        %1087 = vmatpush1.msra.mxu0 0.0
        %1088 = vmatprep.subr.mxu0 0.0
        %1089 = vmatpush1.msra.mxu0 0.0
        %1090 = vmatprep.subr.mxu0 0.0
        %1091 = vmatpush1.msra.mxu0 0.0
        %1092 = vmatprep.subr.mxu0 0.0
        %1093 = vmatpush1.msra.mxu0 0.0
        %1094 = vmatprep.subr.mxu0 0.0
        %1095 = vmatpush1.msra.mxu0 0.0
        %1096 = vmatprep.subr.mxu0 0.0
        %1097 = vmatpush1.msra.mxu0 0.0
        %1098 = vmatprep.subr.mxu0 0.0
        %1099 = vmatpush1.msra.mxu0 0.0
        %1100 = vmatprep.subr.mxu0 0.0
        %1101 = vmatpush1.msra.mxu0 0.0
        %1102 = vmatprep.subr.mxu0 0.0
        %1103 = vmatpush1.msra.mxu0 0.0
        %1104 = vmatprep.subr.mxu0 0.0
        %1105 = vmatpush1.msra.mxu0 0.0
        %1106 = vmatprep.subr.mxu0 0.0
        %1107 = vmatpush1.msra.mxu0 0.0
        %1108 = vmatprep.subr.mxu0 0.0
        %1109 = vmatpush1.msra.mxu0 0.0
        %1110 = vmatprep.subr.mxu0 0.0
        %1111 = vmatpush1.msra.mxu0 0.0
        %1112 = vmatprep.mubr.f32.mxu0 0.0
        %1113 = vmatmul.mubr.f32.gmra.mrb[0].mxu0 %v1046
        %v1114 = vpop.f32.mrb[0].mxu0
        %v1115 = vadd.f32 %v1042, %v1114
        %v1116 = vpop.f32.mrb[0].mxu0
        %1117 = vdwg.mxu0
        %1118 = vst.msk [vmem:[%s268] sm:$0xff] %vm1044, %v1115
        %s1119 = sand.u32 %s141, 1
        %s1120 = scalar_lea.sflag [#allocation4], %s1119
        %s1121 = sand.u32 %s141, 1
        %s1122 = smul.addr %s1121, 8
        %s1123 = scalar_lea.vmem [#allocation8], %s1122
        // Predicated region
        $region53: #{tpu_custom_call.1} parent=39 // pred_check
          %p1124 = pneg %p151
        $region54: #{tpu_custom_call.1} parent=39 // pred_check_branch
          %1126 = sbr.rel (%p1124) target = $region56
        $region55: #{tpu_custom_call.1} parent=39 // pred_region
          %s1128 = ssub.s32 128, 128
          %1129 = vsyncadd %s1120, %s1128
          %s1130 = smul.addr %s23, 128
          %s1131 = scalar_lea.hbm %s5, %s1130
          %s1133 = sshll.u32 %s1123, 4
          %s1134 = int_to_ptr.vmem [resolvable:$true] %s1133
          %1136 = dma.vmem_to_hbm [thread:$0]  %s1134, 128, %s1131, %s1120
        $region56: #{tpu_custom_call.1} parent=39 // pred_fallthru
          _
      $region40: #{tpu_custom_call.1} parent=5 // pred_fallthru
        _
      %p1137 = scmp.le.s32.totalorder 2, %s18
      // Predicated region
      $region57: #{tpu_custom_call.1} parent=5 // pred_check
        %p1138 = pneg %p1137
      $region58: #{tpu_custom_call.1} parent=5 // pred_check_branch
        %1140 = sbr.rel (%p1138) target = $region60
      $region59: #{tpu_custom_call.1} parent=5 // pred_region
        %s1141 = ssub.s32 %s18, 2
        // Predicated region
        $region61: #{tpu_custom_call.1} parent=59 // pred_check
          %p1142 = pneg %p157
        $region62: #{tpu_custom_call.1} parent=59 // pred_check_branch
          %1144 = sbr.rel (%p1142) target = $region64
        $region63: #{tpu_custom_call.1} parent=59 // pred_region
          %s1145 = sand.u32 %s142, 1
          %s1146 = scalar_lea.sflag [#allocation4], %s1145
          %s1147 = sand.u32 %s142, 1
          %s1148 = smul.addr %s1147, 8
          %s1149 = scalar_lea.vmem [#allocation8], %s1148
          %1150 = dma.done %s1146, 128
        $region64: #{tpu_custom_call.1} parent=59 // pred_fallthru
          _
      $region60: #{tpu_custom_call.1} parent=5 // pred_fallthru
        _
    $region6: #{tpu_custom_call.1} parent=1 // loop_footer
      %s22 = sadd.s32 1, %s18
    $region7: #{tpu_custom_call.1} parent=1 // loop_footer_branch
      %17 = sbr.rel target = $region3
    $region8: #{tpu_custom_call.1} parent=1 // loop_exit
      _
    %1151 = vsyncpa [#allocation3], 1
    %s1152 = scalar_lea.sflag [#allocation3], 1
    %1153 = vsyncpa %s1152, 1
    %1154 = vsyncpa [#allocation6], 1
    %1155 = vsyncpa [#allocation4], 1
    %s1156 = scalar_lea.sflag [#allocation4], 1
    %1157 = vsyncpa %s1156, 1

</llo_original>
